<compile_context>
chip_gen: v5e
topology: v5e:2x2
jax: 0.10.0
libtpu: 0.0.40
codegen_flags: <defaults>
</compile_context>

<pallas_src>
import functools

import numpy as np
import jax
import jax.numpy as jnp
from jax.experimental import pallas as pl
from jax.experimental.pallas import tpu as pltpu

# ----------------------------- config (synthetic, small) --------------------
POOLING_SIZE = 7                  # cfg.POOLING_SIZE
SPATIAL_SCALE = 1.0 / 16.0        # ROIAlign(..., 1/16, 0)
DOUT_BASE = 32                    # dout_base_model (512 in real model)
RPN_CHANNELS = 32                 # RPN conv channels (512 in real model)
NUM_ANCHORS = 9                   # 3 scales x 3 ratios
HEAD_HIDDEN = 128                 # _head_to_tail output dim (4096 real); lane-dense
CLASSES = ("__background__", "car", "person", "dog", "cat")
N_CLASSES = len(CLASSES)
CLASS_AGNOSTIC = False

_VMEM_LIMIT = 32 * 1024 * 1024    # explicit scoped-VMEM budget (safe on v5e/v6e/v7x)
_NEG_INF = -1e9                   # softmax masking bias for padded lanes


def _ru(v, m):
    return (v + m - 1) // m * m


# ----------------------------- grid-tiled matmul (MXU) -----------------------
def _matmul_kernel(x_ref, w_ref, b_ref, o_ref, acc_ref, *, relu):
    @pl.when(pl.program_id(2) == 0)
    def _init():
        acc_ref[...] = jnp.zeros_like(acc_ref)

    acc_ref[...] += jnp.dot(x_ref[...], w_ref[...],
                            preferred_element_type=jnp.float32)

    @pl.when(pl.program_id(2) == pl.num_programs(2) - 1)
    def _finalize():
        y = acc_ref[...] + b_ref[...]
        if relu:
            y = jnp.maximum(y, 0.0)
        o_ref[...] = y.astype(o_ref.dtype)


def matmul_tiled(x, w, b, relu=False):
    """y = relu?(x @ w + b): bf16 operands, f32 accumulation, K-tiled grid."""
    M, K = x.shape
    K2, N = w.shape
    assert K == K2
    if M >= 128:
        tm, Mp = 128, _ru(M, 128)
    else:
        tm = _ru(M, 16)                 # bf16-friendly sublane multiple
        Mp = tm
    tn = 128                            # lane-dense output stores
    Np = _ru(N, tn)
    Kp = _ru(K, 128)
    if Kp > 512:
        tk = 512
        Kp = _ru(K, tk)
    else:
        tk = Kp
    xp = jnp.pad(x.astype(jnp.bfloat16), ((0, Mp - M), (0, Kp - K)))
    wp = jnp.pad(w.astype(jnp.bfloat16), ((0, Kp - K), (0, Np - N)))
    bp = jnp.pad(b.astype(jnp.float32).reshape(1, N), ((0, 0), (0, Np - N)))
    grid = (Mp // tm, Np // tn, Kp // tk)
    out = pl.pallas_call(
        functools.partial(_matmul_kernel, relu=relu),
        out_shape=jax.ShapeDtypeStruct((Mp, Np), jnp.float32),
        grid_spec=pltpu.PrefetchScalarGridSpec(
            num_scalar_prefetch=0,
            grid=grid,
            in_specs=[
                pl.BlockSpec((tm, tk), lambda i, j, k: (i, k)),
                pl.BlockSpec((tk, tn), lambda i, j, k: (k, j)),
                pl.BlockSpec((1, tn), lambda i, j, k: (0, j)),
            ],
            out_specs=pl.BlockSpec((tm, tn), lambda i, j, k: (i, j)),
            scratch_shapes=[pltpu.VMEM((tm, tn), jnp.float32)],
        ),
        compiler_params=pltpu.CompilerParams(
            dimension_semantics=("parallel", "parallel", "arbitrary"),
            vmem_limit_bytes=_VMEM_LIMIT,
        ),
    )(xp, wp, bp)
    return out[:M, :N]


# ----------------------------- fused RPN kernel -------------------------------
def _rpn_kernel(pfeat_ref, wconv_ref, bconv_ref, whead_ref, bhead_ref, out_ref,
                *, hF, wF, C, Crpn):
    # 3x3 conv via 9 shifted taps accumulated in-kernel (no HBM im2col),
    # then both 1x1 heads in one lane-dense matmul.
    pb = pfeat_ref[0]                                    # (hF+2, wF+2, C) bf16
    M = hF * wF
    acc = jnp.zeros((M, Crpn), jnp.float32)
    t = 0
    for dy in range(3):
        for dx in range(3):
            tap = pb[dy:dy + hF, dx:dx + wF, :].reshape(M, C)
            acc = acc + jnp.dot(tap, wconv_ref[t * C:(t + 1) * C, :],
                                preferred_element_type=jnp.float32)
            t += 1
    rpn_feat = jnp.maximum(acc + bconv_ref[...], 0.0)
    heads = jnp.dot(rpn_feat.astype(jnp.bfloat16), whead_ref[...],
                    preferred_element_type=jnp.float32) + bhead_ref[...]
    out_ref[0] = heads                                   # (M, 128) lane-dense


def pallas_rpn(params, base_feat):
    B, hF, wF, C = base_feat.shape
    A = NUM_ANCHORS
    Crpn = RPN_CHANNELS
    M = hF * wF
    nhead = 2 * A + 4 * A
    padded = jnp.pad(base_feat, ((0, 0), (1, 1), (1, 1), (0, 0))).astype(jnp.bfloat16)
    wconv = params["rpn_conv_w"].astype(jnp.bfloat16)          # (9*C, Crpn)
    bconv = params["rpn_conv_b"].reshape(1, Crpn).astype(jnp.float32)
    # combined lane-dense head weight slab: [cls (2A) | bbox (4A) | zero pad]
    Wh = jnp.zeros((Crpn, 128), jnp.float32)
    Wh = Wh.at[:, :2 * A].set(params["rpn_cls_w"])
    Wh = Wh.at[:, 2 * A:nhead].set(params["rpn_bbox_w"])
    Wh = Wh.astype(jnp.bfloat16)
    bh = jnp.zeros((1, 128), jnp.float32)
    bh = bh.at[0, :2 * A].set(params["rpn_cls_b"])
    bh = bh.at[0, 2 * A:nhead].set(params["rpn_bbox_b"])
    heads = pl.pallas_call(
        functools.partial(_rpn_kernel, hF=hF, wF=wF, C=C, Crpn=Crpn),
        out_shape=jax.ShapeDtypeStruct((B, M, 128), jnp.float32),
        grid=(B,),
        in_specs=[
            pl.BlockSpec((1, hF + 2, wF + 2, C), lambda b: (b, 0, 0, 0)),
            pl.BlockSpec((9 * C, Crpn), lambda b: (0, 0)),
            pl.BlockSpec((1, Crpn), lambda b: (0, 0)),
            pl.BlockSpec((Crpn, 128), lambda b: (0, 0)),
            pl.BlockSpec((1, 128), lambda b: (0, 0)),
        ],
        out_specs=pl.BlockSpec((1, M, 128), lambda b: (b, 0, 0)),
        compiler_params=pltpu.CompilerParams(
            dimension_semantics=("parallel",),
            vmem_limit_bytes=_VMEM_LIMIT,
        ),
    )(padded, wconv, bconv, Wh, bh)
    rpn_cls = heads[:, :, :2 * A].reshape(B, hF, wF, 2 * A)
    rpn_bbox = heads[:, :, 2 * A:nhead].reshape(B, hF, wF, 4 * A)
    return rpn_cls, rpn_bbox


# ----------------------------- ROIAlign kernel --------------------------------
def _bilinear_axis_weight(start, bin_size, bin_idx, cell_idx, size):
    # One bilinear sample at each bin center (sampling_ratio=0, 1 sample/bin).
    s = start + (bin_idx + 0.5) * bin_size
    valid = (s >= -1.0) & (s <= float(size))
    sc = jnp.maximum(s, 0.0)
    lo = jnp.minimum(jnp.floor(sc), float(size - 1))
    hi = jnp.minimum(lo + 1.0, float(size - 1))
    frac = jnp.where(lo >= float(size - 1), 0.0, sc - lo)
    w = (jnp.where(cell_idx == lo, 1.0 - frac, 0.0)
         + jnp.where(cell_idx == hi, frac, 0.0))
    return jnp.where(valid, w, 0.0)


def _roi_align_kernel(bidx_ref, rois_ref, grids_ref, feat_ref, out_ref,
                      *, H, W, C, P, scale, block_r):
    g = pl.program_id(0)
    ybin = grids_ref[0]          # (P*P, H*W)  bin-y index per output row
    xbin = grids_ref[1]          # (P*P, H*W)  bin-x index per output row
    ycell = grids_ref[2]         # (P*P, H*W)  feature-cell y per column
    xcell = grids_ref[3]         # (P*P, H*W)  feature-cell x per column
    for j in range(block_r):
        r = g * block_r + j
        b = bidx_ref[r]
        x1 = rois_ref[r * 5 + 1] * scale
        y1 = rois_ref[r * 5 + 2] * scale
        x2 = rois_ref[r * 5 + 3] * scale
        y2 = rois_ref[r * 5 + 4] * scale
        roi_w = jnp.maximum(x2 - x1, 1.0)
        roi_h = jnp.maximum(y2 - y1, 1.0)
        wy = _bilinear_axis_weight(y1, roi_h / P, ybin, ycell, H)
        wx = _bilinear_axis_weight(x1, roi_w / P, xbin, xcell, W)
        wyx = wy * wx                                        # (P*P, H*W)
        feat_b = feat_ref[b].reshape(H * W, C)               # per-ROI batch image
        out_ref[j] = jnp.dot(wyx, feat_b, preferred_element_type=jnp.float32)


def roi_align(base_feat, rois, block_r=8):
    # base_feat: (B, H, W, C) NHWC ; rois: (N, 5) [batch_idx, x1, y1, x2, y2]
    # TODO(synk): exact torchvision ROIAlign(sampling_ratio=0) averages
    # ceil(bin/1) samples per bin; we take the single bin-center sample.
    B, H, W, C = base_feat.shape
    N = rois.shape[0]
    P = POOLING_SIZE
    Np = _ru(N, block_r)
    rois_p = jnp.pad(rois, ((0, Np - N), (0, 0)))
    bidx = jnp.clip(rois_p[:, 0].astype(jnp.int32), 0, B - 1)
    rois_flat = rois_p.reshape(-1).astype(jnp.float32)       # 1D SMEM (small padding)
    PP, HW = P * P, H * W
    rr = np.arange(PP)
    cc = np.arange(HW)
    grids = np.stack([
        np.broadcast_to((rr // P)[:, None], (PP, HW)),
        np.broadcast_to((rr % P)[:, None], (PP, HW)),
        np.broadcast_to((cc // W)[None, :], (PP, HW)),
        np.broadcast_to((cc % W)[None, :], (PP, HW)),
    ]).astype(np.float32)                                    # (4, PP, HW)
    kernel = functools.partial(_roi_align_kernel, H=H, W=W, C=C, P=P,
                               scale=SPATIAL_SCALE, block_r=block_r)
    out = pl.pallas_call(
        kernel,
        out_shape=jax.ShapeDtypeStruct((Np, PP, C), jnp.float32),
        grid=(Np // block_r,),
        in_specs=[
            pl.BlockSpec(memory_space=pltpu.MemorySpace.SMEM),     # batch indices
            pl.BlockSpec(memory_space=pltpu.MemorySpace.SMEM),     # roi table (flat)
            pl.BlockSpec((4, PP, HW), lambda g: (0, 0, 0)),        # index grids
            pl.BlockSpec((B, H, W, C), lambda g: (0, 0, 0, 0)),    # feature map, DMA'd once
        ],
        out_specs=pl.BlockSpec((block_r, PP, C), lambda g: (g, 0, 0)),
        compiler_params=pltpu.CompilerParams(
            dimension_semantics=("parallel",),
            vmem_limit_bytes=_VMEM_LIMIT,
        ),
    )(bidx, rois_flat, jnp.asarray(grids), base_feat)
    return out[:N]                                           # (N, P*P, C)


# ----------------------------- fused cls/bbox head kernel ---------------------
def _head_final_kernel(h_ref, wc_ref, bc_ref, wb_ref, bb_ref,
                       cls_ref, prob_ref, box_ref):
    h = h_ref[...]
    cls = jnp.dot(h, wc_ref[...], preferred_element_type=jnp.float32) + bc_ref[...]
    cls_ref[...] = cls
    # softmax in f32; padded lanes carry a -1e9 bias so exp underflows to 0.
    m = jnp.max(cls, axis=1, keepdims=True)
    e = jnp.exp(cls - m)
    s = jnp.sum(e, axis=1, keepdims=True)
    prob_ref[...] = e * pl.reciprocal(s, approx=True)
    box_ref[...] = jnp.dot(h, wb_ref[...], preferred_element_type=jnp.float32) + bb_ref[...]


def pallas_head_outputs(hidden, params):
    N, Hd = hidden.shape
    nb = params["bbox_w"].shape[1]
    Np = _ru(N, 8)
    h = jnp.pad(hidden, ((0, Np - N), (0, 0))).astype(jnp.bfloat16)
    Wc = jnp.zeros((Hd, 128), jnp.float32).at[:, :N_CLASSES].set(params["cls_w"]).astype(jnp.bfloat16)
    bc = jnp.full((1, 128), _NEG_INF, jnp.float32).at[0, :N_CLASSES].set(params["cls_b"])
    Wb = jnp.zeros((Hd, 128), jnp.float32).at[:, :nb].set(params["bbox_w"]).astype(jnp.bfloat16)
    bb = jnp.zeros((1, 128), jnp.float32).at[0, :nb].set(params["bbox_b"])
    vmem = pl.BlockSpec(memory_space=pltpu.MemorySpace.VMEM)
    cls, prob, box = pl.pallas_call(
        _head_final_kernel,
        out_shape=(jax.ShapeDtypeStruct((Np, 128), jnp.float32),) * 3,
        in_specs=[vmem] * 5,
        out_specs=(vmem, vmem, vmem),
        compiler_params=pltpu.CompilerParams(vmem_limit_bytes=_VMEM_LIMIT),
    )(h, Wc, bc, Wb, bb)
    return cls[:N, :N_CLASSES], prob[:N, :N_CLASSES], box[:N, :nb]


# ----------------------------- parameters -------------------------------------
def init_params(key):
    ks = jax.random.split(key, 8)
    p = {}
    # RCNN_base: Conv2d(3, DOUT_BASE, k=16, stride=16) + ReLU (synthetic /16 backbone);
    # weight flatten order matches NHWC patch order (kh, kw, c_in).
    p["base_w"] = jax.random.normal(ks[0], (16 * 16 * 3, DOUT_BASE), jnp.float32) * 0.01
    p["base_b"] = jnp.zeros((DOUT_BASE,), jnp.float32)
    # RPN_Conv 3x3 (flatten order (dy, dx, c_in)), RPN_cls_score / RPN_bbox_pred 1x1.
    p["rpn_conv_w"] = jax.random.normal(ks[1], (3 * 3 * DOUT_BASE, RPN_CHANNELS), jnp.float32) * 0.01
    p["rpn_conv_b"] = jnp.zeros((RPN_CHANNELS,), jnp.float32)
    p["rpn_cls_w"] = jax.random.normal(ks[2], (RPN_CHANNELS, 2 * NUM_ANCHORS), jnp.float32) * 0.01
    p["rpn_cls_b"] = jnp.zeros((2 * NUM_ANCHORS,), jnp.float32)
    p["rpn_bbox_w"] = jax.random.normal(ks[3], (RPN_CHANNELS, 4 * NUM_ANCHORS), jnp.float32) * 0.01
    p["rpn_bbox_b"] = jnp.zeros((4 * NUM_ANCHORS,), jnp.float32)
    # _head_to_tail fc, RCNN_cls_score, RCNN_bbox_pred (normal_init 0.01 / 0.001).
    D = POOLING_SIZE * POOLING_SIZE * DOUT_BASE
    p["fc_w"] = jax.random.normal(ks[4], (D, HEAD_HIDDEN), jnp.float32) * 0.01
    p["fc_b"] = jnp.zeros((HEAD_HIDDEN,), jnp.float32)
    p["cls_w"] = jax.random.normal(ks[5], (HEAD_HIDDEN, N_CLASSES), jnp.float32) * 0.01
    p["cls_b"] = jnp.zeros((N_CLASSES,), jnp.float32)
    nb = 4 if CLASS_AGNOSTIC else 4 * N_CLASSES
    p["bbox_w"] = jax.random.normal(ks[6], (HEAD_HIDDEN, nb), jnp.float32) * 0.001
    p["bbox_b"] = jnp.zeros((nb,), jnp.float32)
    return p


# ----------------------------- forward -----------------------------------------
def faster_rcnn_forward(params, im_data, im_info, gt_boxes, num_boxes, rois_s):
    # im_info/gt_boxes/num_boxes are only consumed by the RPN proposal /
    # proposal-target layers (TODO below).
    del im_info, gt_boxes, num_boxes
    B, Cin, H, W = im_data.shape
    x = jnp.transpose(im_data, (0, 2, 3, 1))                    # -> NHWC

    # --- RCNN_base: stride-16 patch conv + ReLU (tiled MXU matmul) ---
    hF, wF = H // 16, W // 16
    patches = x.reshape(B, hF, 16, wF, 16, Cin).transpose(0, 1, 3, 2, 4, 5)
    patches = patches.reshape(B * hF * wF, 16 * 16 * Cin)
    base = matmul_tiled(patches, params["base_w"], params["base_b"], relu=True)
    base_feat = base.reshape(B, hF, wF, DOUT_BASE)

    # --- RCNN_rpn (eval) ---
    if rois_s.shape[1] != 1:
        # External rois supplied: exactly as in the PyTorch forward they
        # override the RPN proposals, so the RPN head outputs are dead work
        # and are skipped entirely (perf feedback).
        rois = rois_s
    else:
        rpn_cls_score, rpn_bbox_pred = pallas_rpn(params, base_feat)
        del rpn_cls_score, rpn_bbox_pred
        # TODO(synk): anchor generation + NMS proposal layer (_RPN proposal
        # layer and _ProposalTargetLayer) have no clean Pallas equivalent;
        # rois are placeholders here.
        rois = jnp.zeros((B, 1, 5), jnp.float32)

    # --- cfg.POOLING_MODE == 'align' ---
    rois_flat = rois.reshape(-1, 5)
    pooled = roi_align(base_feat, rois_flat)                    # (N, P*P, C)
    pooled_flat = pooled.reshape(rois_flat.shape[0], -1)

    # --- _head_to_tail (fc+ReLU via tiled matmul) + cls/bbox/softmax (fused) ---
    pooled_feat = matmul_tiled(pooled_flat, params["fc_w"], params["fc_b"], relu=True)
    cls_score, cls_prob, bbox_pred = pallas_head_outputs(pooled_feat, params)

    return rois, cls_prob, bbox_pred, base_feat, pooled_feat, cls_score


# ----------------------------- main ---------------------------------------------
if __name__ == "__main__":
    key = jax.random.PRNGKey(0)
    kp, k1, k2, k3, k4 = jax.random.split(key, 5)
    params = init_params(kp)

    B, R = 2, 4
    im_data = jax.random.normal(k1, (B, 3, 64, 64), jnp.float32)       # NCHW
    im_info = jnp.tile(jnp.array([[64.0, 64.0, 1.0]], jnp.float32), (B, 1))
    gt_boxes = jnp.zeros((B, 3, 5), jnp.float32)
    num_boxes = jnp.zeros((B,), jnp.int32)

    xy1 = jax.random.uniform(k2, (B, R, 2), minval=0.0, maxval=30.0)
    wh = jax.random.uniform(k3, (B, R, 2), minval=8.0, maxval=32.0)
    xy2 = jnp.minimum(xy1 + wh, 63.0)
    bcol = jnp.broadcast_to(jnp.arange(B, dtype=jnp.float32)[:, None, None], (B, R, 1))
    rois_s = jnp.concatenate([bcol, xy1, xy2], axis=-1)                # (B, R, 5)

    # Smoke-test the fused RPN kernel (the forward skips it because external
    # rois are supplied and its outputs would otherwise be dead work).
    dummy_feat = jax.random.normal(k4, (B, 4, 4, DOUT_BASE), jnp.float32)
    rpn_cls, rpn_bbox = pallas_rpn(params, dummy_feat)
    jax.block_until_ready((rpn_cls, rpn_bbox))
    assert rpn_cls.shape == (B, 4, 4, 2 * NUM_ANCHORS)
    assert rpn_bbox.shape == (B, 4, 4, 4 * NUM_ANCHORS)
    assert bool(jnp.all(jnp.isfinite(rpn_cls)))

    outs = jax.jit(faster_rcnn_forward)(params, im_data, im_info, gt_boxes,
                                        num_boxes, rois_s)
    jax.block_until_ready(outs)
    rois, cls_prob, bbox_pred, base_feat, pooled_feat, cls_score = outs

    assert rois.shape == (B, R, 5)
    assert cls_prob.shape == (B * R, N_CLASSES)
    assert bbox_pred.shape == (B * R, 4 * N_CLASSES)
    assert base_feat.shape == (B, 4, 4, DOUT_BASE)          # NHWC
    assert pooled_feat.shape == (B * R, HEAD_HIDDEN)
    assert cls_score.shape == (B * R, N_CLASSES)
    assert bool(jnp.all(jnp.isfinite(cls_prob)))
    assert bool(jnp.all(jnp.isfinite(bbox_pred)))
    print("KERNEL_OK")
</pallas_src>

<mosaic_0001>
module attributes {stable_mosaic.version = 11 : i64} {
  func.func @_rpn_kernel(%arg0: i32, %arg1: memref<1x6x6x32xbf16, #tpu.memory_space<vmem>>, %arg2: memref<288x32xbf16, #tpu.memory_space<vmem>>, %arg3: memref<1x32xf32, #tpu.memory_space<vmem>>, %arg4: memref<32x128xbf16, #tpu.memory_space<vmem>>, %arg5: memref<1x128xf32, #tpu.memory_space<vmem>>, %arg6: memref<1x16x128xf32, #tpu.memory_space<vmem>>) attributes {dimension_semantics = [#tpu.dimension_semantics<parallel>], iteration_bounds = array<i64: 2>, scalar_prefetch = 0 : i64, scratch_operands = 0 : i64, tpu.core_type = #tpu.core_type<tc>, window_params = [{transform_indices = @transform_0, window_bounds = array<i64: 1, 6, 6, 32>}, {pipeline_mode = #tpu.pipeline_mode<synchronous>, transform_indices = @transform_1, window_bounds = array<i64: 288, 32>}, {pipeline_mode = #tpu.pipeline_mode<synchronous>, transform_indices = @transform_2, window_bounds = array<i64: 1, 32>}, {pipeline_mode = #tpu.pipeline_mode<synchronous>, transform_indices = @transform_3, window_bounds = array<i64: 32, 128>}, {pipeline_mode = #tpu.pipeline_mode<synchronous>, transform_indices = @transform_4, window_bounds = array<i64: 1, 128>}, {transform_indices = @transform_5, window_bounds = array<i64: 1, 16, 128>}]} {
    %c0 = arith.constant 0 : index
    %c0_0 = arith.constant 0 : index
    %c0_1 = arith.constant 0 : index
    %c0_2 = arith.constant 0 : index
    %0 = vector.load %arg1[%c0, %c0_0, %c0_1, %c0_2] : memref<1x6x6x32xbf16, #tpu.memory_space<vmem>>, vector<1x6x6x32xbf16>
    %1 = vector.shape_cast %0 : vector<1x6x6x32xbf16> to vector<6x6x32xbf16>
    %cst = arith.constant 0.000000e+00 : f32
    %2 = vector.broadcast %cst : f32 to vector<16x32xf32>
    %3 = vector.extract_strided_slice %1 {offsets = [0, 0, 0], sizes = [4, 4, 32], strides = [1, 1, 1]} : vector<6x6x32xbf16> to vector<4x4x32xbf16>
    %4 = vector.shape_cast %3 : vector<4x4x32xbf16> to vector<16x32xbf16>
    %c0_3 = arith.constant 0 : index
    %c0_4 = arith.constant 0 : index
    %5 = vector.load %arg2[%c0_3, %c0_4] : memref<288x32xbf16, #tpu.memory_space<vmem>>, vector<32x32xbf16>
    %cst_5 = arith.constant dense<0.000000e+00> : vector<16x32xf32>
    %6 = tpu.matmul %4, %5, %cst_5 {dimension_numbers = #tpu.dot_dimension_numbers<[1], [0], [0], [1], [0, 0, 1, 1], [], []>} : vector<16x32xbf16>, vector<32x32xbf16>, vector<16x32xf32> -> vector<16x32xf32>
    %7 = arith.addf %2, %6 : vector<16x32xf32>
    %8 = vector.extract_strided_slice %1 {offsets = [0, 1, 0], sizes = [4, 4, 32], strides = [1, 1, 1]} : vector<6x6x32xbf16> to vector<4x4x32xbf16>
    %9 = vector.shape_cast %8 : vector<4x4x32xbf16> to vector<16x32xbf16>
    %c32 = arith.constant 32 : index
    %c0_6 = arith.constant 0 : index
    %10 = vector.load %arg2[%c32, %c0_6] : memref<288x32xbf16, #tpu.memory_space<vmem>>, vector<32x32xbf16>
    %cst_7 = arith.constant dense<0.000000e+00> : vector<16x32xf32>
    %11 = tpu.matmul %9, %10, %cst_7 {dimension_numbers = #tpu.dot_dimension_numbers<[1], [0], [0], [1], [0, 0, 1, 1], [], []>} : vector<16x32xbf16>, vector<32x32xbf16>, vector<16x32xf32> -> vector<16x32xf32>
    %12 = arith.addf %7, %11 : vector<16x32xf32>
    %13 = vector.extract_strided_slice %1 {offsets = [0, 2, 0], sizes = [4, 4, 32], strides = [1, 1, 1]} : vector<6x6x32xbf16> to vector<4x4x32xbf16>
    %14 = vector.shape_cast %13 : vector<4x4x32xbf16> to vector<16x32xbf16>
    %c64 = arith.constant 64 : index
    %c0_8 = arith.constant 0 : index
    %15 = vector.load %arg2[%c64, %c0_8] : memref<288x32xbf16, #tpu.memory_space<vmem>>, vector<32x32xbf16>
    %cst_9 = arith.constant dense<0.000000e+00> : vector<16x32xf32>
    %16 = tpu.matmul %14, %15, %cst_9 {dimension_numbers = #tpu.dot_dimension_numbers<[1], [0], [0], [1], [0, 0, 1, 1], [], []>} : vector<16x32xbf16>, vector<32x32xbf16>, vector<16x32xf32> -> vector<16x32xf32>
    %17 = arith.addf %12, %16 : vector<16x32xf32>
    %18 = vector.extract_strided_slice %1 {offsets = [1, 0, 0], sizes = [4, 4, 32], strides = [1, 1, 1]} : vector<6x6x32xbf16> to vector<4x4x32xbf16>
    %19 = vector.shape_cast %18 : vector<4x4x32xbf16> to vector<16x32xbf16>
    %c96 = arith.constant 96 : index
    %c0_10 = arith.constant 0 : index
    %20 = vector.load %arg2[%c96, %c0_10] : memref<288x32xbf16, #tpu.memory_space<vmem>>, vector<32x32xbf16>
    %cst_11 = arith.constant dense<0.000000e+00> : vector<16x32xf32>
    %21 = tpu.matmul %19, %20, %cst_11 {dimension_numbers = #tpu.dot_dimension_numbers<[1], [0], [0], [1], [0, 0, 1, 1], [], []>} : vector<16x32xbf16>, vector<32x32xbf16>, vector<16x32xf32> -> vector<16x32xf32>
    %22 = arith.addf %17, %21 : vector<16x32xf32>
    %23 = vector.extract_strided_slice %1 {offsets = [1, 1, 0], sizes = [4, 4, 32], strides = [1, 1, 1]} : vector<6x6x32xbf16> to vector<4x4x32xbf16>
    %24 = vector.shape_cast %23 : vector<4x4x32xbf16> to vector<16x32xbf16>
    %c128 = arith.constant 128 : index
    %c0_12 = arith.constant 0 : index
    %25 = vector.load %arg2[%c128, %c0_12] : memref<288x32xbf16, #tpu.memory_space<vmem>>, vector<32x32xbf16>
    %cst_13 = arith.constant dense<0.000000e+00> : vector<16x32xf32>
    %26 = tpu.matmul %24, %25, %cst_13 {dimension_numbers = #tpu.dot_dimension_numbers<[1], [0], [0], [1], [0, 0, 1, 1], [], []>} : vector<16x32xbf16>, vector<32x32xbf16>, vector<16x32xf32> -> vector<16x32xf32>
    %27 = arith.addf %22, %26 : vector<16x32xf32>
    %28 = vector.extract_strided_slice %1 {offsets = [1, 2, 0], sizes = [4, 4, 32], strides = [1, 1, 1]} : vector<6x6x32xbf16> to vector<4x4x32xbf16>
    %29 = vector.shape_cast %28 : vector<4x4x32xbf16> to vector<16x32xbf16>
    %c160 = arith.constant 160 : index
    %c0_14 = arith.constant 0 : index
    %30 = vector.load %arg2[%c160, %c0_14] : memref<288x32xbf16, #tpu.memory_space<vmem>>, vector<32x32xbf16>
    %cst_15 = arith.constant dense<0.000000e+00> : vector<16x32xf32>
    %31 = tpu.matmul %29, %30, %cst_15 {dimension_numbers = #tpu.dot_dimension_numbers<[1], [0], [0], [1], [0, 0, 1, 1], [], []>} : vector<16x32xbf16>, vector<32x32xbf16>, vector<16x32xf32> -> vector<16x32xf32>
    %32 = arith.addf %27, %31 : vector<16x32xf32>
    %33 = vector.extract_strided_slice %1 {offsets = [2, 0, 0], sizes = [4, 4, 32], strides = [1, 1, 1]} : vector<6x6x32xbf16> to vector<4x4x32xbf16>
    %34 = vector.shape_cast %33 : vector<4x4x32xbf16> to vector<16x32xbf16>
    %c192 = arith.constant 192 : index
    %c0_16 = arith.constant 0 : index
    %35 = vector.load %arg2[%c192, %c0_16] : memref<288x32xbf16, #tpu.memory_space<vmem>>, vector<32x32xbf16>
    %cst_17 = arith.constant dense<0.000000e+00> : vector<16x32xf32>
    %36 = tpu.matmul %34, %35, %cst_17 {dimension_numbers = #tpu.dot_dimension_numbers<[1], [0], [0], [1], [0, 0, 1, 1], [], []>} : vector<16x32xbf16>, vector<32x32xbf16>, vector<16x32xf32> -> vector<16x32xf32>
    %37 = arith.addf %32, %36 : vector<16x32xf32>
    %38 = vector.extract_strided_slice %1 {offsets = [2, 1, 0], sizes = [4, 4, 32], strides = [1, 1, 1]} : vector<6x6x32xbf16> to vector<4x4x32xbf16>
    %39 = vector.shape_cast %38 : vector<4x4x32xbf16> to vector<16x32xbf16>
    %c224 = arith.constant 224 : index
    %c0_18 = arith.constant 0 : index
    %40 = vector.load %arg2[%c224, %c0_18] : memref<288x32xbf16, #tpu.memory_space<vmem>>, vector<32x32xbf16>
    %cst_19 = arith.constant dense<0.000000e+00> : vector<16x32xf32>
    %41 = tpu.matmul %39, %40, %cst_19 {dimension_numbers = #tpu.dot_dimension_numbers<[1], [0], [0], [1], [0, 0, 1, 1], [], []>} : vector<16x32xbf16>, vector<32x32xbf16>, vector<16x32xf32> -> vector<16x32xf32>
    %42 = arith.addf %37, %41 : vector<16x32xf32>
    %43 = vector.extract_strided_slice %1 {offsets = [2, 2, 0], sizes = [4, 4, 32], strides = [1, 1, 1]} : vector<6x6x32xbf16> to vector<4x4x32xbf16>
    %44 = vector.shape_cast %43 : vector<4x4x32xbf16> to vector<16x32xbf16>
    %c256 = arith.constant 256 : index
    %c0_20 = arith.constant 0 : index
    %45 = vector.load %arg2[%c256, %c0_20] : memref<288x32xbf16, #tpu.memory_space<vmem>>, vector<32x32xbf16>
    %cst_21 = arith.constant dense<0.000000e+00> : vector<16x32xf32>
    %46 = tpu.matmul %44, %45, %cst_21 {dimension_numbers = #tpu.dot_dimension_numbers<[1], [0], [0], [1], [0, 0, 1, 1], [], []>} : vector<16x32xbf16>, vector<32x32xbf16>, vector<16x32xf32> -> vector<16x32xf32>
    %47 = arith.addf %42, %46 : vector<16x32xf32>
    %c0_22 = arith.constant 0 : index
    %c0_23 = arith.constant 0 : index
    %48 = vector.load %arg3[%c0_22, %c0_23] : memref<1x32xf32, #tpu.memory_space<vmem>>, vector<1x32xf32>
    %49 = vector.broadcast %48 : vector<1x32xf32> to vector<16x32xf32>
    %50 = arith.addf %47, %49 : vector<16x32xf32>
    %cst_24 = arith.constant 0.000000e+00 : f32
    %51 = vector.broadcast %cst_24 : f32 to vector<16x32xf32>
    %52 = arith.maximumf %50, %51 : vector<16x32xf32>
    %53 = arith.truncf %52 : vector<16x32xf32> to vector<16x32xbf16>
    %c0_25 = arith.constant 0 : index
    %c0_26 = arith.constant 0 : index
    %54 = vector.load %arg4[%c0_25, %c0_26] : memref<32x128xbf16, #tpu.memory_space<vmem>>, vector<32x128xbf16>
    %cst_27 = arith.constant dense<0.000000e+00> : vector<16x128xf32>
    %55 = tpu.matmul %53, %54, %cst_27 {dimension_numbers = #tpu.dot_dimension_numbers<[1], [0], [0], [1], [0, 0, 1, 1], [], []>} : vector<16x32xbf16>, vector<32x128xbf16>, vector<16x128xf32> -> vector<16x128xf32>
    %c0_28 = arith.constant 0 : index
    %c0_29 = arith.constant 0 : index
    %56 = vector.load %arg5[%c0_28, %c0_29] : memref<1x128xf32, #tpu.memory_space<vmem>>, vector<1x128xf32>
    %57 = vector.broadcast %56 : vector<1x128xf32> to vector<16x128xf32>
    %58 = arith.addf %55, %57 : vector<16x128xf32>
    %c0_30 = arith.constant 0 : index
    %c0_31 = arith.constant 0 : index
    %c0_32 = arith.constant 0 : index
    %59 = vector.load %arg6[%c0_30, %c0_31, %c0_32] : memref<1x16x128xf32, #tpu.memory_space<vmem>>, vector<1x16x128xf32>
    %60 = vector.shape_cast %59 : vector<1x16x128xf32> to vector<16x128xf32>
    %61 = vector.shape_cast %58 : vector<16x128xf32> to vector<1x16x128xf32>
    tpu.vector_store %arg6[%c0_30, %c0_31, %c0_32], %61 {strides = array<i32>} : memref<1x16x128xf32, #tpu.memory_space<vmem>>, vector<1x16x128xf32>,
    return
  }
  func.func @transform_0(%arg0: i32) -> (i32, i32, i32, i32) {
    %c0_i32 = arith.constant 0 : i32
    %c0_i32_0 = arith.constant 0 : i32
    %c0_i32_1 = arith.constant 0 : i32
    %c0_i32_2 = arith.constant 0 : i32
    return %arg0, %c0_i32, %c0_i32_0, %c0_i32_1 : i32, i32, i32, i32
  }
  func.func @transform_1(%arg0: i32) -> (i32, i32) {
    %c0_i32 = arith.constant 0 : i32
    %c0_i32_0 = arith.constant 0 : i32
    %c0_i32_1 = arith.constant 0 : i32
    return %c0_i32, %c0_i32_0 : i32, i32
  }
  func.func @transform_2(%arg0: i32) -> (i32, i32) {
    %c0_i32 = arith.constant 0 : i32
    %c0_i32_0 = arith.constant 0 : i32
    %c0_i32_1 = arith.constant 0 : i32
    return %c0_i32, %c0_i32_0 : i32, i32
  }
  func.func @transform_3(%arg0: i32) -> (i32, i32) {
    %c0_i32 = arith.constant 0 : i32
    %c0_i32_0 = arith.constant 0 : i32
    %c0_i32_1 = arith.constant 0 : i32
    return %c0_i32, %c0_i32_0 : i32, i32
  }
  func.func @transform_4(%arg0: i32) -> (i32, i32) {
    %c0_i32 = arith.constant 0 : i32
    %c0_i32_0 = arith.constant 0 : i32
    %c0_i32_1 = arith.constant 0 : i32
    return %c0_i32, %c0_i32_0 : i32, i32
  }
  func.func @transform_5(%arg0: i32) -> (i32, i32, i32) {
    %c0_i32 = arith.constant 0 : i32
    %c0_i32_0 = arith.constant 0 : i32
    %c0_i32_1 = arith.constant 0 : i32
    return %arg0, %c0_i32, %c0_i32_0 : i32, i32, i32
  }
}

</mosaic_0001>

<llo_original>
// kernel: tpu_custom_call.1
$region0: #{tpu_custom_call.1}
  #allocation0 [shape = 'u32[]', space=smem, size = 0x4, offset = 0x4, fixed_abs, tag = 'smem constant byte address 0x4 - core index']
  #allocation1 [shape = 'u32[72,128]{1,0:T(1,128)}', space=vmem, size = 0x9000, scoped, tag = 'internal scratch']
  %s0 = inlined_call_operand.vmem [shape: bf16[2,6,6,32], index: 0, kind: input, shape index: {}]
  %s1 = inlined_call_operand.vmem [shape: bf16[288,32], index: 1, kind: input, shape index: {}]
  %s2 = inlined_call_operand.vmem [shape: f32[1,32], index: 2, kind: input, shape index: {}]
  %s3 = inlined_call_operand.vmem [shape: bf16[32,128], index: 3, kind: input, shape index: {}]
  %s4 = inlined_call_operand.vmem [shape: f32[1,128], index: 4, kind: input, shape index: {}]
  %s5 = inlined_call_operand.hbm [shape: f32[2,16,128], index: 5, kind: output, shape index: {}]
  %s6 = sld [smem:[#allocation0]]
  $region53: #{tpu_custom_call.1} parent=0
    _
  %s8 = ssub.s32 1, %s6
  %s9 = scalar_select 0, %s8, %s6
  $region1: #{tpu_custom_call.1} parent=0
    #allocation2 [shape = 'u8[16384]{0}', space=vmem, size = 0x4000, scoped, tag = 'output window, operand 0']
    #allocation3 [shape = 's32[2]{0}', space=sflag, size = 0x8, scoped, tag = 'scoped memory for tpu_custom_call.1']
    %10 = vsyncpa [#allocation3], 0
    %s11 = scalar_lea.sflag [#allocation3], 1
    %12 = vsyncpa %s11, 0
    loop: start=0, step=1, limit=4
    $region2: #{tpu_custom_call.1} parent=1 // loop_pre_header
      _
    $region3: #{tpu_custom_call.1} parent=1 // loop_header
      %s14 = sphi 0, %s18
      %p15 = scmp.ge.s32.totalorder %s14, 4
      %s24 = sphi 0, %s26
      %s27 = sphi 0, %s24
      %s28 = sphi 0, %s27
      %s44 = sphi 0, %s28
      %s48 = sphi 0, %s48
      %s50 = sphi 0, %s48
      %s51 = sphi 0, %s50
      %s65 = sphi 0, %s51
      %s69 = sphi 0, %s69
      %s71 = sphi 0, %s69
      %s72 = sphi 0, %s71
      %s86 = sphi 0, %s72
      %s90 = sphi 0, %s90
      %s92 = sphi 0, %s90
      %s93 = sphi 0, %s92
      %s107 = sphi 0, %s93
      %s111 = sphi 0, %s111
      %s113 = sphi 0, %s111
      %s114 = sphi 0, %s113
      %s128 = sphi 0, %s114
      %s134 = sphi 0, %s136
      %s137 = sphi 0, %s134
      %s138 = sphi 0, %s137
      %s154 = sphi 0, %s138
    $region4: #{tpu_custom_call.1} parent=1 // loop_header_branch
      %17 = sbr.rel (%p15) target = $region8
    $region5: #{tpu_custom_call.1} parent=1 // loop_body
      %s19 = ssub.s32 %s14, 1
      %s20 = ssub.s32 %s14, 2
      %s21 = sadd.s32 %s14, 1
      %s22 = ssub.s32 %s14, %s21
      %p23 = scmp.eq.s32.totalorder %s22, 0
      %s25 = sadd.s32 %s24, 1
      %s26 = scalar_select %p23, %s24, %s25
      %p29 = pneg %p23
      %p30 = scmp.eq.s32.totalorder %s14, 1
      %p31 = por %p29, %p30
      %p32 = scmp.ne.s32.totalorder %s24, %s27
      %p33 = scmp.eq.s32.totalorder %s14, 0
      %p34 = por %p32, %p33
      %p35 = scmp.ne.s32.totalorder %s24, %s27
      %p36 = scmp.eq.s32.totalorder %s19, 1
      %p37 = por %p35, %p36
      %p38 = scmp.ne.s32.totalorder %s27, %s28
      %p39 = scmp.eq.s32.totalorder %s19, 0
      %p40 = por %p38, %p39
      %p41 = scmp.ne.s32.totalorder %s27, %s28
      %p42 = scmp.eq.s32.totalorder %s20, 1
      %p43 = por %p41, %p42
      %p45 = scmp.ne.s32.totalorder %s28, %s44
      %p46 = scmp.eq.s32.totalorder %s20, 0
      %p47 = por %p45, %p46
      %s49 = sadd.s32 %s48, 1
      %p52 = scmp.eq.s32.totalorder %s14, 1
      %p53 = scmp.ne.s32.totalorder %s48, %s50
      %p54 = scmp.eq.s32.totalorder %s14, 0
      %p55 = por %p53, %p54
      %p56 = scmp.ne.s32.totalorder %s48, %s50
      %p57 = scmp.eq.s32.totalorder %s19, 1
      %p58 = por %p56, %p57
      %p59 = scmp.ne.s32.totalorder %s50, %s51
      %p60 = scmp.eq.s32.totalorder %s19, 0
      %p61 = por %p59, %p60
      %p62 = scmp.ne.s32.totalorder %s50, %s51
      %p63 = scmp.eq.s32.totalorder %s20, 1
      %p64 = por %p62, %p63
      %p66 = scmp.ne.s32.totalorder %s51, %s65
      %p67 = scmp.eq.s32.totalorder %s20, 0
      %p68 = por %p66, %p67
      %s70 = sadd.s32 %s69, 1
      %p73 = scmp.eq.s32.totalorder %s14, 1
      %p74 = scmp.ne.s32.totalorder %s69, %s71
      %p75 = scmp.eq.s32.totalorder %s14, 0
      %p76 = por %p74, %p75
      %p77 = scmp.ne.s32.totalorder %s69, %s71
      %p78 = scmp.eq.s32.totalorder %s19, 1
      %p79 = por %p77, %p78
      %p80 = scmp.ne.s32.totalorder %s71, %s72
      %p81 = scmp.eq.s32.totalorder %s19, 0
      %p82 = por %p80, %p81
      %p83 = scmp.ne.s32.totalorder %s71, %s72
      %p84 = scmp.eq.s32.totalorder %s20, 1
      %p85 = por %p83, %p84
      %p87 = scmp.ne.s32.totalorder %s72, %s86
      %p88 = scmp.eq.s32.totalorder %s20, 0
      %p89 = por %p87, %p88
      %s91 = sadd.s32 %s90, 1
      %p94 = scmp.eq.s32.totalorder %s14, 1
      %p95 = scmp.ne.s32.totalorder %s90, %s92
      %p96 = scmp.eq.s32.totalorder %s14, 0
      %p97 = por %p95, %p96
      %p98 = scmp.ne.s32.totalorder %s90, %s92
      %p99 = scmp.eq.s32.totalorder %s19, 1
      %p100 = por %p98, %p99
      %p101 = scmp.ne.s32.totalorder %s92, %s93
      %p102 = scmp.eq.s32.totalorder %s19, 0
      %p103 = por %p101, %p102
      %p104 = scmp.ne.s32.totalorder %s92, %s93
      %p105 = scmp.eq.s32.totalorder %s20, 1
      %p106 = por %p104, %p105
      %p108 = scmp.ne.s32.totalorder %s93, %s107
      %p109 = scmp.eq.s32.totalorder %s20, 0
      %p110 = por %p108, %p109
      %s112 = sadd.s32 %s111, 1
      %p115 = scmp.eq.s32.totalorder %s14, 1
      %p116 = scmp.ne.s32.totalorder %s111, %s113
      %p117 = scmp.eq.s32.totalorder %s14, 0
      %p118 = por %p116, %p117
      %p119 = scmp.ne.s32.totalorder %s111, %s113
      %p120 = scmp.eq.s32.totalorder %s19, 1
      %p121 = por %p119, %p120
      %p122 = scmp.ne.s32.totalorder %s113, %s114
      %p123 = scmp.eq.s32.totalorder %s19, 0
      %p124 = por %p122, %p123
      %p125 = scmp.ne.s32.totalorder %s113, %s114
      %p126 = scmp.eq.s32.totalorder %s20, 1
      %p127 = por %p125, %p126
      %p129 = scmp.ne.s32.totalorder %s114, %s128
      %p130 = scmp.eq.s32.totalorder %s20, 0
      %p131 = por %p129, %p130
      %s132 = ssub.s32 %s14, %s21
      %p133 = scmp.eq.s32.totalorder %s132, 0
      %s135 = sadd.s32 %s134, 1
      %s136 = scalar_select %p133, %s134, %s135
      %p139 = pneg %p133
      %p140 = scmp.eq.s32.totalorder %s14, 1
      %p141 = por %p139, %p140
      %p142 = scmp.ne.s32.totalorder %s134, %s137
      %p143 = scmp.eq.s32.totalorder %s14, 0
      %p144 = por %p142, %p143
      %p145 = scmp.ne.s32.totalorder %s134, %s137
      %p146 = scmp.eq.s32.totalorder %s19, 1
      %p147 = por %p145, %p146
      %p148 = scmp.ne.s32.totalorder %s137, %s138
      %p149 = scmp.eq.s32.totalorder %s19, 0
      %p150 = por %p148, %p149
      %p151 = scmp.ne.s32.totalorder %s137, %s138
      %p152 = scmp.eq.s32.totalorder %s20, 1
      %p153 = por %p151, %p152
      %p155 = scmp.ne.s32.totalorder %s138, %s154
      %p156 = scmp.eq.s32.totalorder %s20, 0
      %p157 = por %p155, %p156
      %p158 = scmp.le.s32.totalorder 1, %s14
      %p159 = scmp.lt.s32.totalorder %s14, 3
      %p160 = pnand %p158, %p159
      %p161 = pneg %p160
      // Predicated region
      $region9: #{tpu_custom_call.1} parent=5 // pred_check
        _
      $region10: #{tpu_custom_call.1} parent=5 // pred_check_branch
        %163 = sbr.rel (%p160) target = $region12
      $region11: #{tpu_custom_call.1} parent=5 // pred_region
        %s164 = ssub.s32 %s14, 1
        // Predicated region
        $region13: #{tpu_custom_call.1} parent=11 // pred_check
          %p165 = pneg %p61
        $region14: #{tpu_custom_call.1} parent=11 // pred_check_branch
          %167 = sbr.rel (%p165) target = $region16
        $region15: #{tpu_custom_call.1} parent=11 // pred_region
          _
        $region16: #{tpu_custom_call.1} parent=11 // pred_fallthru
          _
        // Predicated region
        $region17: #{tpu_custom_call.1} parent=11 // pred_check
          %p168 = pneg %p82
        $region18: #{tpu_custom_call.1} parent=11 // pred_check_branch
          %170 = sbr.rel (%p168) target = $region20
        $region19: #{tpu_custom_call.1} parent=11 // pred_region
          _
        $region20: #{tpu_custom_call.1} parent=11 // pred_fallthru
          _
        // Predicated region
        $region21: #{tpu_custom_call.1} parent=11 // pred_check
          %p171 = pneg %p103
        $region22: #{tpu_custom_call.1} parent=11 // pred_check_branch
          %173 = sbr.rel (%p171) target = $region24
        $region23: #{tpu_custom_call.1} parent=11 // pred_region
          _
        $region24: #{tpu_custom_call.1} parent=11 // pred_fallthru
          _
        // Predicated region
        $region25: #{tpu_custom_call.1} parent=11 // pred_check
          %p174 = pneg %p124
        $region26: #{tpu_custom_call.1} parent=11 // pred_check_branch
          %176 = sbr.rel (%p174) target = $region28
        $region27: #{tpu_custom_call.1} parent=11 // pred_region
          _
        $region28: #{tpu_custom_call.1} parent=11 // pred_fallthru
          _
      $region12: #{tpu_custom_call.1} parent=5 // pred_fallthru
        _
      %p177 = scmp.lt.s32.totalorder %s14, 2
      // Predicated region
      $region29: #{tpu_custom_call.1} parent=5 // pred_check
        %p178 = pneg %p177
      $region30: #{tpu_custom_call.1} parent=5 // pred_check_branch
        %180 = sbr.rel (%p178) target = $region32
      $region31: #{tpu_custom_call.1} parent=5 // pred_region
        // Predicated region
        $region33: #{tpu_custom_call.1} parent=31 // pred_check
          %p181 = pneg %p34
        $region34: #{tpu_custom_call.1} parent=31 // pred_check_branch
          %183 = sbr.rel (%p181) target = $region36
        $region35: #{tpu_custom_call.1} parent=31 // pred_region
          %p184 = scmp.lt.s32.totalorder %s14, 1
          %s185 = scalar_select %p184, %s14, 1
          %s186 = smul.addr %s185, 6
          %s187 = smul.addr %s186, 4
          %s188 = scalar_lea.vmem %s0, %s187
        $region36: #{tpu_custom_call.1} parent=31 // pred_fallthru
          _
      $region32: #{tpu_custom_call.1} parent=5 // pred_fallthru
        _
      %p189 = scmp.le.s32.totalorder 1, %s14
      %p190 = scmp.lt.s32.totalorder %s14, 3
      %p191 = pnand %p189, %p190
      %p192 = pneg %p191
      // Predicated region
      $region37: #{tpu_custom_call.1} parent=5 // pred_check
        _
      $region38: #{tpu_custom_call.1} parent=5 // pred_check_branch
        %194 = sbr.rel (%p191) target = $region40
      $region39: #{tpu_custom_call.1} parent=5 // pred_region
        %s195 = ssub.s32 %s14, 1
        %p196 = scmp.lt.s32.totalorder %s19, 1
        %s197 = scalar_select %p196, %s19, 1
        %s198 = smul.addr %s197, 6
        %s199 = smul.addr %s198, 4
        %s200 = scalar_lea.vmem %s0, %s199
        %p201 = pneg %p40
        %p202 = pneg %p37
        %p203 = pneg %p61
        %p204 = pneg %p58
        %p205 = pneg %p82
        %p206 = pneg %p79
        %p207 = pneg %p103
        %p208 = pneg %p100
        %p209 = pneg %p124
        %p210 = pneg %p121
        %p211 = pneg %p150
        %p212 = pneg %p147
        %s213 = sand.u32 %s137, 1
        %s214 = scalar_lea.sflag [#allocation3], %s213
        %s215 = sand.u32 %s137, 1
        %s216 = smul.addr %s215, 16
        %s217 = scalar_lea.vmem [#allocation2], %s216
        %p218 = scmp.lt.s32.totalorder %s19, 1
        %s219 = scalar_select %p218, %s19, 1
        %s220 = smul.addr %s219, 6
        %s221 = smul.addr %s220, 4
        %s222 = scalar_lea.vmem %s0, %s221
        %v224 = vld [vmem:[%s222] sm:$0x7]
        %v225 = vld [vmem:[%s222 + $0x4] sm:$0x7]
        %v226 = vld [vmem:[%s222 + $0x8] sm:$0x7]
        %v227 = vld [vmem:[%s222 + $0xc] sm:$0x7]
        %v228 = vld [vmem:[%s222 + $0x10] sm:$0x7]
        %v229 = vld [vmem:[%s222 + $0x14] sm:$0x7]
        %v230 = vld [vmem:[%s1] sm:$0xf]
        %v231 = vld [vmem:[%s1 + $0x4] sm:$0xf]
        %v232 = vld [vmem:[%s1 + $0x8] sm:$0xf]
        %v233 = vld [vmem:[%s1 + $0xc] sm:$0xf]
        %v238 = vrot.slane %v224, 2
        %v239 = vrot.slane %v225, 2
        %v240 = vrot.slane %v226, 2
        %v241 = vrot.slane %v227, 2
        %vm242 = vcmask 1041408
        %v245 = vsel %vm242, %v224, %v238
        %vm246 = vcmask 1043458
        %v247 = vsel %vm246, %v224, %v238
        %v249 = vrot.slane %v247, 2
        %v252 = vsel %vm242, %v225, %v239
        %v253 = vsel %vm246, %v225, %v239
        %v255 = vrot.slane %v253, 2
        %v258 = vsel %vm242, %v226, %v240
        %v259 = vsel %vm246, %v226, %v240
        %v261 = vrot.slane %v259, 2
        %v264 = vsel %vm242, %v227, %v241
        %v265 = vsel %vm246, %v227, %v241
        %v267 = vrot.slane %v265, 2
        %vm268 = vsmask.f32 1280
        %vm269 = vsmask.f32 3336
        %vm270 = vmor %vm268, %vm269
        %vm271 = vsmask.f32 5392
        %vm272 = vmor %vm270, %vm271
        %vm273 = vsmask.f32 7448
        %vm274 = vmor %vm272, %vm273
        %v275 = vshrl.u32 %v245, 16
        %v277 = vrot.slane %v275, 6
        %v278 = vshll.u32 %v245, 16
        %v280 = vrot.slane %v278, 7
        %v281 = vor.u32 %v277, %v280
        %v282 = vrot.slane %v281, 2
        %v284 = vshll.u32 %v249, 16
        %v286 = vrot.slane %v284, 7
        %v287 = vsel %vm274, %v282, %v286
        %v288 = vshrl.u32 %v252, 16
        %v290 = vrot.slane %v288, 6
        %v291 = vshll.u32 %v252, 16
        %v293 = vrot.slane %v291, 7
        %v294 = vor.u32 %v290, %v293
        %v295 = vrot.slane %v294, 2
        %v297 = vshll.u32 %v255, 16
        %v299 = vrot.slane %v297, 7
        %v300 = vsel %vm274, %v295, %v299
        %v301 = vshrl.u32 %v258, 16
        %v303 = vrot.slane %v301, 6
        %v304 = vshll.u32 %v258, 16
        %v306 = vrot.slane %v304, 7
        %v307 = vor.u32 %v303, %v306
        %v308 = vrot.slane %v307, 2
        %v310 = vshll.u32 %v261, 16
        %v312 = vrot.slane %v310, 7
        %v313 = vsel %vm274, %v308, %v312
        %v314 = vshrl.u32 %v264, 16
        %v316 = vrot.slane %v314, 6
        %v317 = vshll.u32 %v264, 16
        %v319 = vrot.slane %v317, 7
        %v320 = vor.u32 %v316, %v319
        %v321 = vrot.slane %v320, 2
        %v323 = vshll.u32 %v267, 16
        %v325 = vrot.slane %v323, 7
        %v326 = vsel %vm274, %v321, %v325
        %v327 = vld [vmem:[%s1 + $0x10] sm:$0xf]
        %v328 = vld [vmem:[%s1 + $0x14] sm:$0xf]
        %v329 = vld [vmem:[%s1 + $0x18] sm:$0xf]
        %v330 = vld [vmem:[%s1 + $0x1c] sm:$0xf]
        %332 = vst [vmem:[#allocation1] ss:$4 sm:$0xff] %v287
        %s334 = scalar_lea.vmem [#allocation1], 1
        %335 = vst [vmem:[%s334] ss:$4 sm:$0xff] %v300
        %s337 = scalar_lea.vmem [#allocation1], 2
        %338 = vst [vmem:[%s337] ss:$4 sm:$0xff] %v313
        %s340 = scalar_lea.vmem [#allocation1], 3
        %341 = vst [vmem:[%s340] ss:$4 sm:$0xff] %v326
        %v342 = vld.sshfl [vmem:[#allocation1] sm:$0xff pattern:$0x73625140]
        %v347 = vunpack.c.l.b16 %v327
        %v348 = vunpack.c.l.b16 %v328
        %v349 = vunpack.c.l.b16 %v329
        %v350 = vunpack.c.l.b16 %v330
        %v351 = vpack.c.b16 %v348, %v347
        %v352 = vpack.c.b16 %v350, %v349
        %vm355 = vcmask 261120
        %v356 = vsel %vm355, %v342, 0
        %358 = vmatpush.bf16.msra.mxu0 0
        %359 = vmatpush.bf16.msra.mxu0 0
        %360 = vmatpush.bf16.msra.mxu0 0
        %361 = vmatpush.bf16.msra.mxu0 0
        %362 = vmatpush.bf16.msra.mxu0 0
        %363 = vmatpush.bf16.msra.mxu0 0
        %364 = vmatpush.bf16.msra.mxu0 %v352
        %365 = vmatpush.bf16.msra.mxu0 %v351
        %366 = vmatmul.bf16.gmra.mxu0 %v356
        %v367 = vpop.f32.mrf.mxu0
        %v368 = vadd.f32 0.0, %v367
        %v369 = vpop.f32.mrf.mxu0
        %v370 = vadd.f32 0.0, %v369
        %371 = vdwg.mxu0
        %372 = vst [vmem:[#allocation1] ss:$4 sm:$0xff] %v224
        %s373 = scalar_lea.vmem [#allocation1], 1
        %374 = vst [vmem:[%s373] ss:$4 sm:$0xff] %v225
        %s375 = scalar_lea.vmem [#allocation1], 2
        %376 = vst [vmem:[%s375] ss:$4 sm:$0xff] %v226
        %s377 = scalar_lea.vmem [#allocation1], 3
        %378 = vst [vmem:[%s377] ss:$4 sm:$0xff] %v227
        %v379 = vld.sshfl [vmem:[#allocation1] sm:$0xff pattern:$0x73625140]
        %v384 = vunpack.c.l.b16 %v230
        %v385 = vunpack.c.l.b16 %v231
        %v386 = vunpack.c.l.b16 %v232
        %v387 = vunpack.c.l.b16 %v233
        %v388 = vpack.c.b16 %v385, %v384
        %v389 = vpack.c.b16 %v387, %v386
        %v392 = vsel %vm355, %v379, 0
        %394 = vmatpush.bf16.msra.mxu0 0
        %395 = vmatpush.bf16.msra.mxu0 0
        %396 = vmatpush.bf16.msra.mxu0 0
        %397 = vmatpush.bf16.msra.mxu0 0
        %398 = vmatpush.bf16.msra.mxu0 0
        %399 = vmatpush.bf16.msra.mxu0 0
        %400 = vmatpush.bf16.msra.mxu0 %v389
        %401 = vmatpush.bf16.msra.mxu0 %v388
        %402 = vmatmul.bf16.gmra.mxu0 %v392
        %v403 = vpop.f32.mrf.mxu0
        %v404 = vadd.f32 %v368, %v403
        %v405 = vpop.f32.mrf.mxu0
        %v406 = vadd.f32 %v370, %v405
        %407 = vdwg.mxu0
        %vm412 = vcmask 1040384
        %vm413 = vcmask 1042434
        %vm414 = vmor %vm412, %vm413
        %vm415 = vcmask 1044484
        %vm416 = vmor %vm414, %vm415
        %vm417 = vcmask 1046534
        %vm418 = vmor %vm416, %vm417
        %v419 = vrot.slane %v245, 7
        %v420 = vrot.slane %v419, 2
        %v421 = vrot.slane %v249, 7
        %v422 = vsel %vm418, %v420, %v421
        %v423 = vrot.slane %v252, 7
        %v424 = vrot.slane %v423, 2
        %v425 = vrot.slane %v255, 7
        %v426 = vsel %vm418, %v424, %v425
        %v427 = vrot.slane %v258, 7
        %v428 = vrot.slane %v427, 2
        %v429 = vrot.slane %v261, 7
        %v430 = vsel %vm418, %v428, %v429
        %v431 = vrot.slane %v264, 7
        %v432 = vrot.slane %v431, 2
        %v433 = vrot.slane %v267, 7
        %v434 = vsel %vm418, %v432, %v433
        %v435 = vld [vmem:[%s1 + $0x20] sm:$0xf]
        %v436 = vld [vmem:[%s1 + $0x24] sm:$0xf]
        %v437 = vld [vmem:[%s1 + $0x28] sm:$0xf]
        %v438 = vld [vmem:[%s1 + $0x2c] sm:$0xf]
        %440 = vst [vmem:[#allocation1] ss:$4 sm:$0xff] %v422
        %s442 = scalar_lea.vmem [#allocation1], 1
        %443 = vst [vmem:[%s442] ss:$4 sm:$0xff] %v426
        %s445 = scalar_lea.vmem [#allocation1], 2
        %446 = vst [vmem:[%s445] ss:$4 sm:$0xff] %v430
        %s448 = scalar_lea.vmem [#allocation1], 3
        %449 = vst [vmem:[%s448] ss:$4 sm:$0xff] %v434
        %v450 = vld.sshfl [vmem:[#allocation1] sm:$0xff pattern:$0x73625140]
        %v455 = vunpack.c.l.b16 %v435
        %v456 = vunpack.c.l.b16 %v436
        %v457 = vunpack.c.l.b16 %v437
        %v458 = vunpack.c.l.b16 %v438
        %v459 = vpack.c.b16 %v456, %v455
        %v460 = vpack.c.b16 %v458, %v457
        %v463 = vsel %vm355, %v450, 0
        %465 = vmatpush.bf16.msra.mxu0 0
        %466 = vmatpush.bf16.msra.mxu0 0
        %467 = vmatpush.bf16.msra.mxu0 0
        %468 = vmatpush.bf16.msra.mxu0 0
        %469 = vmatpush.bf16.msra.mxu0 0
        %470 = vmatpush.bf16.msra.mxu0 0
        %471 = vmatpush.bf16.msra.mxu0 %v460
        %472 = vmatpush.bf16.msra.mxu0 %v459
        %473 = vmatmul.bf16.gmra.mxu0 %v463
        %v474 = vpop.f32.mrf.mxu0
        %v475 = vadd.f32 0.0, %v474
        %v476 = vpop.f32.mrf.mxu0
        %v477 = vadd.f32 0.0, %v476
        %478 = vdwg.mxu0
        %v479 = vadd.f32 %v404, %v475
        %v480 = vadd.f32 %v406, %v477
        %v481 = vld [vmem:[%s1 + $0x30] sm:$0xf]
        %v482 = vld [vmem:[%s1 + $0x34] sm:$0xf]
        %v483 = vld [vmem:[%s1 + $0x38] sm:$0xf]
        %v484 = vld [vmem:[%s1 + $0x3c] sm:$0xf]
        %485 = vst [vmem:[#allocation1] ss:$4 sm:$0xff] %v225
        %s486 = scalar_lea.vmem [#allocation1], 1
        %487 = vst [vmem:[%s486] ss:$4 sm:$0xff] %v226
        %s488 = scalar_lea.vmem [#allocation1], 2
        %489 = vst [vmem:[%s488] ss:$4 sm:$0xff] %v227
        %s491 = scalar_lea.vmem [#allocation1], 3
        %492 = vst [vmem:[%s491] ss:$4 sm:$0xff] %v228
        %v493 = vld.sshfl [vmem:[#allocation1] sm:$0xff pattern:$0x73625140]
        %v498 = vunpack.c.l.b16 %v481
        %v499 = vunpack.c.l.b16 %v482
        %v500 = vunpack.c.l.b16 %v483
        %v501 = vunpack.c.l.b16 %v484
        %v502 = vpack.c.b16 %v499, %v498
        %v503 = vpack.c.b16 %v501, %v500
        %v506 = vsel %vm355, %v493, 0
        %508 = vmatpush.bf16.msra.mxu0 0
        %509 = vmatpush.bf16.msra.mxu0 0
        %510 = vmatpush.bf16.msra.mxu0 0
        %511 = vmatpush.bf16.msra.mxu0 0
        %512 = vmatpush.bf16.msra.mxu0 0
        %513 = vmatpush.bf16.msra.mxu0 0
        %514 = vmatpush.bf16.msra.mxu0 %v503
        %515 = vmatpush.bf16.msra.mxu0 %v502
        %516 = vmatmul.bf16.gmra.mxu0 %v506
        %v517 = vpop.f32.mrf.mxu0
        %v518 = vadd.f32 0.0, %v517
        %v519 = vpop.f32.mrf.mxu0
        %v520 = vadd.f32 0.0, %v519
        %521 = vdwg.mxu0
        %v522 = vadd.f32 %v479, %v518
        %v523 = vadd.f32 %v480, %v520
        %v525 = vrot.slane %v228, 2
        %v527 = vsel %vm242, %v228, %v525
        %v528 = vsel %vm246, %v228, %v525
        %v530 = vrot.slane %v528, 2
        %v531 = vshrl.u32 %v527, 16
        %v533 = vrot.slane %v531, 6
        %v534 = vshll.u32 %v527, 16
        %v536 = vrot.slane %v534, 7
        %v537 = vor.u32 %v533, %v536
        %v538 = vrot.slane %v537, 2
        %v540 = vshll.u32 %v530, 16
        %v542 = vrot.slane %v540, 7
        %v543 = vsel %vm274, %v538, %v542
        %v544 = vld [vmem:[%s1 + $0x40] sm:$0xf]
        %v545 = vld [vmem:[%s1 + $0x44] sm:$0xf]
        %v546 = vld [vmem:[%s1 + $0x48] sm:$0xf]
        %v547 = vld [vmem:[%s1 + $0x4c] sm:$0xf]
        %548 = vst [vmem:[#allocation1] ss:$4 sm:$0xff] %v300
        %s549 = scalar_lea.vmem [#allocation1], 1
        %550 = vst [vmem:[%s549] ss:$4 sm:$0xff] %v313
        %s551 = scalar_lea.vmem [#allocation1], 2
        %552 = vst [vmem:[%s551] ss:$4 sm:$0xff] %v326
        %s554 = scalar_lea.vmem [#allocation1], 3
        %555 = vst [vmem:[%s554] ss:$4 sm:$0xff] %v543
        %v556 = vld.sshfl [vmem:[#allocation1] sm:$0xff pattern:$0x73625140]
        %v561 = vunpack.c.l.b16 %v544
        %v562 = vunpack.c.l.b16 %v545
        %v563 = vunpack.c.l.b16 %v546
        %v564 = vunpack.c.l.b16 %v547
        %v565 = vpack.c.b16 %v562, %v561
        %v566 = vpack.c.b16 %v564, %v563
        %v569 = vsel %vm355, %v556, 0
        %571 = vmatpush.bf16.msra.mxu0 0
        %572 = vmatpush.bf16.msra.mxu0 0
        %573 = vmatpush.bf16.msra.mxu0 0
        %574 = vmatpush.bf16.msra.mxu0 0
        %575 = vmatpush.bf16.msra.mxu0 0
        %576 = vmatpush.bf16.msra.mxu0 0
        %577 = vmatpush.bf16.msra.mxu0 %v566
        %578 = vmatpush.bf16.msra.mxu0 %v565
        %579 = vmatmul.bf16.gmra.mxu0 %v569
        %v580 = vpop.f32.mrf.mxu0
        %v581 = vadd.f32 0.0, %v580
        %v582 = vpop.f32.mrf.mxu0
        %v583 = vadd.f32 0.0, %v582
        %584 = vdwg.mxu0
        %v585 = vadd.f32 %v522, %v581
        %v586 = vadd.f32 %v523, %v583
        %v588 = vrot.slane %v527, 7
        %v589 = vrot.slane %v588, 2
        %v590 = vrot.slane %v530, 7
        %v591 = vsel %vm418, %v589, %v590
        %v592 = vld [vmem:[%s1 + $0x50] sm:$0xf]
        %v593 = vld [vmem:[%s1 + $0x54] sm:$0xf]
        %v594 = vld [vmem:[%s1 + $0x58] sm:$0xf]
        %v595 = vld [vmem:[%s1 + $0x5c] sm:$0xf]
        %596 = vst [vmem:[#allocation1] ss:$4 sm:$0xff] %v426
        %s597 = scalar_lea.vmem [#allocation1], 1
        %598 = vst [vmem:[%s597] ss:$4 sm:$0xff] %v430
        %s599 = scalar_lea.vmem [#allocation1], 2
        %600 = vst [vmem:[%s599] ss:$4 sm:$0xff] %v434
        %s602 = scalar_lea.vmem [#allocation1], 3
        %603 = vst [vmem:[%s602] ss:$4 sm:$0xff] %v591
        %v604 = vld.sshfl [vmem:[#allocation1] sm:$0xff pattern:$0x73625140]
        %v609 = vunpack.c.l.b16 %v592
        %v610 = vunpack.c.l.b16 %v593
        %v611 = vunpack.c.l.b16 %v594
        %v612 = vunpack.c.l.b16 %v595
        %v613 = vpack.c.b16 %v610, %v609
        %v614 = vpack.c.b16 %v612, %v611
        %v617 = vsel %vm355, %v604, 0
        %619 = vmatpush.bf16.msra.mxu0 0
        %620 = vmatpush.bf16.msra.mxu0 0
        %621 = vmatpush.bf16.msra.mxu0 0
        %622 = vmatpush.bf16.msra.mxu0 0
        %623 = vmatpush.bf16.msra.mxu0 0
        %624 = vmatpush.bf16.msra.mxu0 0
        %625 = vmatpush.bf16.msra.mxu0 %v614
        %626 = vmatpush.bf16.msra.mxu0 %v613
        %627 = vmatmul.bf16.gmra.mxu0 %v617
        %v628 = vpop.f32.mrf.mxu0
        %v629 = vadd.f32 0.0, %v628
        %v630 = vpop.f32.mrf.mxu0
        %v631 = vadd.f32 0.0, %v630
        %632 = vdwg.mxu0
        %v633 = vadd.f32 %v585, %v629
        %v634 = vadd.f32 %v586, %v631
        %v635 = vld [vmem:[%s1 + $0x60] sm:$0xf]
        %v636 = vld [vmem:[%s1 + $0x64] sm:$0xf]
        %v637 = vld [vmem:[%s1 + $0x68] sm:$0xf]
        %v638 = vld [vmem:[%s1 + $0x6c] sm:$0xf]
        %639 = vst [vmem:[#allocation1] ss:$4 sm:$0xff] %v226
        %s640 = scalar_lea.vmem [#allocation1], 1
        %641 = vst [vmem:[%s640] ss:$4 sm:$0xff] %v227
        %s642 = scalar_lea.vmem [#allocation1], 2
        %643 = vst [vmem:[%s642] ss:$4 sm:$0xff] %v228
        %s645 = scalar_lea.vmem [#allocation1], 3
        %646 = vst [vmem:[%s645] ss:$4 sm:$0xff] %v229
        %v647 = vld.sshfl [vmem:[#allocation1] sm:$0xff pattern:$0x73625140]
        %v652 = vunpack.c.l.b16 %v635
        %v653 = vunpack.c.l.b16 %v636
        %v654 = vunpack.c.l.b16 %v637
        %v655 = vunpack.c.l.b16 %v638
        %v656 = vpack.c.b16 %v653, %v652
        %v657 = vpack.c.b16 %v655, %v654
        %v660 = vsel %vm355, %v647, 0
        %662 = vmatpush.bf16.msra.mxu0 0
        %663 = vmatpush.bf16.msra.mxu0 0
        %664 = vmatpush.bf16.msra.mxu0 0
        %665 = vmatpush.bf16.msra.mxu0 0
        %666 = vmatpush.bf16.msra.mxu0 0
        %667 = vmatpush.bf16.msra.mxu0 0
        %668 = vmatpush.bf16.msra.mxu0 %v657
        %669 = vmatpush.bf16.msra.mxu0 %v656
        %670 = vmatmul.bf16.gmra.mxu0 %v660
        %v671 = vpop.f32.mrf.mxu0
        %v672 = vadd.f32 0.0, %v671
        %v673 = vpop.f32.mrf.mxu0
        %v674 = vadd.f32 0.0, %v673
        %675 = vdwg.mxu0
        %v676 = vadd.f32 %v633, %v672
        %v677 = vadd.f32 %v634, %v674
        %v679 = vrot.slane %v229, 2
        %v681 = vsel %vm242, %v229, %v679
        %v682 = vsel %vm246, %v229, %v679
        %v684 = vrot.slane %v682, 2
        %v685 = vshrl.u32 %v681, 16
        %v687 = vrot.slane %v685, 6
        %v688 = vshll.u32 %v681, 16
        %v690 = vrot.slane %v688, 7
        %v691 = vor.u32 %v687, %v690
        %v692 = vrot.slane %v691, 2
        %v694 = vshll.u32 %v684, 16
        %v696 = vrot.slane %v694, 7
        %v697 = vsel %vm274, %v692, %v696
        %v698 = vld [vmem:[%s1 + $0x70] sm:$0xf]
        %v699 = vld [vmem:[%s1 + $0x74] sm:$0xf]
        %v700 = vld [vmem:[%s1 + $0x78] sm:$0xf]
        %v701 = vld [vmem:[%s1 + $0x7c] sm:$0xf]
        %702 = vst [vmem:[#allocation1] ss:$4 sm:$0xff] %v313
        %s703 = scalar_lea.vmem [#allocation1], 1
        %704 = vst [vmem:[%s703] ss:$4 sm:$0xff] %v326
        %s705 = scalar_lea.vmem [#allocation1], 2
        %706 = vst [vmem:[%s705] ss:$4 sm:$0xff] %v543
        %s708 = scalar_lea.vmem [#allocation1], 3
        %709 = vst [vmem:[%s708] ss:$4 sm:$0xff] %v697
        %v710 = vld.sshfl [vmem:[#allocation1] sm:$0xff pattern:$0x73625140]
        %v715 = vunpack.c.l.b16 %v698
        %v716 = vunpack.c.l.b16 %v699
        %v717 = vunpack.c.l.b16 %v700
        %v718 = vunpack.c.l.b16 %v701
        %v719 = vpack.c.b16 %v716, %v715
        %v720 = vpack.c.b16 %v718, %v717
        %v723 = vsel %vm355, %v710, 0
        %725 = vmatpush.bf16.msra.mxu0 0
        %726 = vmatpush.bf16.msra.mxu0 0
        %727 = vmatpush.bf16.msra.mxu0 0
        %728 = vmatpush.bf16.msra.mxu0 0
        %729 = vmatpush.bf16.msra.mxu0 0
        %730 = vmatpush.bf16.msra.mxu0 0
        %731 = vmatpush.bf16.msra.mxu0 %v720
        %732 = vmatpush.bf16.msra.mxu0 %v719
        %733 = vmatmul.bf16.gmra.mxu0 %v723
        %v734 = vpop.f32.mrf.mxu0
        %v735 = vadd.f32 0.0, %v734
        %v736 = vpop.f32.mrf.mxu0
        %v737 = vadd.f32 0.0, %v736
        %738 = vdwg.mxu0
        %v739 = vadd.f32 %v676, %v735
        %v740 = vadd.f32 %v677, %v737
        %v742 = vrot.slane %v681, 7
        %v743 = vrot.slane %v742, 2
        %v744 = vrot.slane %v684, 7
        %v745 = vsel %vm418, %v743, %v744
        %v746 = vld [vmem:[%s1 + $0x80] sm:$0xf]
        %v747 = vld [vmem:[%s1 + $0x84] sm:$0xf]
        %v748 = vld [vmem:[%s1 + $0x88] sm:$0xf]
        %v749 = vld [vmem:[%s1 + $0x8c] sm:$0xf]
        %750 = vst [vmem:[#allocation1] ss:$4 sm:$0xff] %v430
        %s751 = scalar_lea.vmem [#allocation1], 1
        %752 = vst [vmem:[%s751] ss:$4 sm:$0xff] %v434
        %s753 = scalar_lea.vmem [#allocation1], 2
        %754 = vst [vmem:[%s753] ss:$4 sm:$0xff] %v591
        %s756 = scalar_lea.vmem [#allocation1], 3
        %757 = vst [vmem:[%s756] ss:$4 sm:$0xff] %v745
        %v758 = vld.sshfl [vmem:[#allocation1] sm:$0xff pattern:$0x73625140]
        %v763 = vunpack.c.l.b16 %v746
        %v764 = vunpack.c.l.b16 %v747
        %v765 = vunpack.c.l.b16 %v748
        %v766 = vunpack.c.l.b16 %v749
        %v767 = vpack.c.b16 %v764, %v763
        %v768 = vpack.c.b16 %v766, %v765
        %v771 = vsel %vm355, %v758, 0
        %773 = vmatpush.bf16.msra.mxu0 0
        %774 = vmatpush.bf16.msra.mxu0 0
        %775 = vmatpush.bf16.msra.mxu0 0
        %776 = vmatpush.bf16.msra.mxu0 0
        %777 = vmatpush.bf16.msra.mxu0 0
        %778 = vmatpush.bf16.msra.mxu0 0
        %779 = vmatpush.bf16.msra.mxu0 %v768
        %780 = vmatpush.bf16.msra.mxu0 %v767
        %781 = vmatmul.bf16.gmra.mxu0 %v771
        %v782 = vpop.f32.mrf.mxu0
        %v783 = vadd.f32 0.0, %v782
        %v784 = vpop.f32.mrf.mxu0
        %v785 = vadd.f32 0.0, %v784
        %786 = vdwg.mxu0
        %v787 = vadd.f32 %v739, %v783
        %v788 = vadd.f32 %v740, %v785
        %v789 = vld [vmem:[%s2] sm:$0x1]
        %v791 = vperm.slane %v789, 0
        %v793 = vadd.f32 %v787, %v791
        %v794 = vadd.f32 %v788, %v791
        %v795 = vmax.f32 %v793, 0.0
        %v796 = vmax.f32 %v794, 0.0
        %v797 = vpack.c.bf16 %v796, %v795
        %v798 = vld [vmem:[%s3] sm:$0xf]
        %v799 = vld [vmem:[%s3 + $0x4] sm:$0xf]
        %v800 = vld [vmem:[%s3 + $0x8] sm:$0xf]
        %v801 = vld [vmem:[%s3 + $0xc] sm:$0xf]
        %v802 = vld [vmem:[%s4] sm:$0x1]
        %v804 = vperm.slane %v802, 0
        %v810 = vunpack.c.l.b16 %v798
        %v811 = vunpack.c.l.b16 %v799
        %v812 = vunpack.c.l.b16 %v800
        %v813 = vunpack.c.l.b16 %v801
        %v814 = vpack.c.b16 %v811, %v810
        %v815 = vpack.c.b16 %v813, %v812
        %v819 = vsel %vm355, %v797, 0
        %821 = vmatpush.bf16.msra.mxu0 0
        %822 = vmatpush.bf16.msra.mxu0 0
        %823 = vmatpush.bf16.msra.mxu0 0
        %824 = vmatpush.bf16.msra.mxu0 0
        %825 = vmatpush.bf16.msra.mxu0 0
        %826 = vmatpush.bf16.msra.mxu0 0
        %827 = vmatpush.bf16.msra.mxu0 %v815
        %828 = vmatpush.bf16.msra.mxu0 %v814
        %829 = vmatmul.bf16.gmra.mxu0 %v819
        %v830 = vpop.f32.mrf.mxu0
        %v831 = vadd.f32 %v804, %v830
        %v832 = vpop.f32.mrf.mxu0
        %v833 = vadd.f32 %v804, %v832
        %834 = vdwg.mxu0
        %835 = vst [vmem:[%s217] sm:$0xff] %v831
        %836 = vst [vmem:[%s217 + $0x8] sm:$0xff] %v833
        %s837 = sand.u32 %s137, 1
        %s838 = scalar_lea.sflag [#allocation3], %s837
        %s839 = sand.u32 %s137, 1
        %s840 = smul.addr %s839, 16
        %s841 = scalar_lea.vmem [#allocation2], %s840
        // Predicated region
        $region41: #{tpu_custom_call.1} parent=39 // pred_check
          %p842 = pneg %p147
        $region42: #{tpu_custom_call.1} parent=39 // pred_check_branch
          %844 = sbr.rel (%p842) target = $region44
        $region43: #{tpu_custom_call.1} parent=39 // pred_region
          %846 = vsyncadd %s838, 0
          %s847 = smul.addr %s19, 2
          %s848 = smul.addr %s847, 8
          %s849 = scalar_lea.hbm %s5, %s848
          %s850 = sshll.u32 %s841, 4
          %s851 = int_to_ptr.vmem [resolvable:$true] %s850
          %s852 = sshll.u32 %s849, 4
          %s853 = int_to_ptr.hbm [resolvable:$true] %s852
          %858 = dma.vmem_to_hbm [thread:$0]  %s851, 256, %s853, %s838, 128, 128, 8
        $region44: #{tpu_custom_call.1} parent=39 // pred_fallthru
          _
      $region40: #{tpu_custom_call.1} parent=5 // pred_fallthru
        _
      %p859 = scmp.le.s32.totalorder 2, %s14
      // Predicated region
      $region45: #{tpu_custom_call.1} parent=5 // pred_check
        %p860 = pneg %p859
      $region46: #{tpu_custom_call.1} parent=5 // pred_check_branch
        %862 = sbr.rel (%p860) target = $region48
      $region47: #{tpu_custom_call.1} parent=5 // pred_region
        %s863 = ssub.s32 %s14, 2
        // Predicated region
        $region49: #{tpu_custom_call.1} parent=47 // pred_check
          %p864 = pneg %p153
        $region50: #{tpu_custom_call.1} parent=47 // pred_check_branch
          %866 = sbr.rel (%p864) target = $region52
        $region51: #{tpu_custom_call.1} parent=47 // pred_region
          %s867 = sand.u32 %s138, 1
          %s868 = scalar_lea.sflag [#allocation3], %s867
          %s869 = sand.u32 %s138, 1
          %s870 = smul.addr %s869, 16
          %s871 = scalar_lea.vmem [#allocation2], %s870
          %873 = dma.done %s868, 256
        $region52: #{tpu_custom_call.1} parent=47 // pred_fallthru
          _
      $region48: #{tpu_custom_call.1} parent=5 // pred_fallthru
        _
    $region6: #{tpu_custom_call.1} parent=1 // loop_footer
      %s18 = sadd.s32 1, %s14
    $region7: #{tpu_custom_call.1} parent=1 // loop_footer_branch
      %13 = sbr.rel target = $region3
    $region8: #{tpu_custom_call.1} parent=1 // loop_exit
      _
    %874 = vsyncpa [#allocation3], 1
    %s875 = scalar_lea.sflag [#allocation3], 1
    %876 = vsyncpa %s875, 1

</llo_original>
